<compile_context>
chip_gen: v7x
topology: tpu7x:2x2x1
jax: 0.10.0
libtpu: 0.0.40
codegen_flags: <defaults>
</compile_context>

<pallas_src>
import math
import numpy as np

import jax
import jax.numpy as jnp
from jax.experimental import pallas as pl
from jax.experimental.pallas import tpu as pltpu


# ----------------------------------------------------------------------------
# Pallas kernels
# ----------------------------------------------------------------------------

def _im2col_dot_3x3(xpad_ref, w_ref, H, W):
    """3x3 stride-1 conv as a single MXU matmul with K = 9*Cin.

    xpad_ref: (H+2, W+2, Cin) f32 VMEM scratch (already zero padded)
    w_ref:    (9*Cin, Cout) bf16, row index = (kh*3 + kw)*Cin + ci
    returns:  (H*W, Cout) f32 accumulator
    """
    Cin = xpad_ref.shape[2]
    cols = []
    for kh in range(3):
        for kw in range(3):
            cols.append(xpad_ref[kh:kh + H, kw:kw + W, :].reshape(H * W, Cin))
    patches = jnp.concatenate(cols, axis=1).astype(w_ref.dtype)   # (H*W, 9*Cin)
    return jnp.dot(patches, w_ref[...], preferred_element_type=jnp.float32)


def _conv3x3_bn_relu_kernel(x_ref, w_ref, b_ref, scale_ref, shift_ref,
                            o_ref, xpad_ref):
    """proj_i: 3x3 conv + folded BN + ReLU (padding done in-kernel)."""
    H, W, Cout = o_ref.shape[1], o_ref.shape[2], o_ref.shape[3]
    xpad_ref[...] = jnp.zeros_like(xpad_ref)
    xpad_ref[1:1 + H, 1:1 + W, :] = x_ref[0]
    acc = _im2col_dot_3x3(xpad_ref, w_ref, H, W)
    y = jnp.maximum((acc + b_ref[0]) * scale_ref[0] + shift_ref[0], 0.0)
    o_ref[0] = y.reshape(H, W, Cout)


def _add_conv3x3_bn_relu_kernel(xa_ref, xb_ref, w_ref, b_ref, scale_ref,
                                shift_ref, o_ref, xpad_ref):
    """node_i: fused (a + b) -> 3x3 conv + folded BN + ReLU.

    The elementwise add is done once into the padded scratch (not per tap).
    """
    H, W, Cout = o_ref.shape[1], o_ref.shape[2], o_ref.shape[3]
    xpad_ref[...] = jnp.zeros_like(xpad_ref)
    xpad_ref[1:1 + H, 1:1 + W, :] = xa_ref[0] + xb_ref[0]
    acc = _im2col_dot_3x3(xpad_ref, w_ref, H, W)
    y = jnp.maximum((acc + b_ref[0]) * scale_ref[0] + shift_ref[0], 0.0)
    o_ref[0] = y.reshape(H, W, Cout)


def _cbam_store(u, saa_ref, sam_ref, w1_ref, w2_ref, o_ref, pa_ref, pm_ref):
    """CBAM: SpatialAttention then SpectralAttention, writes gated result.

    u:        (H, W, C) f32 value (the upsampled map)
    saa_ref:  (7, W+6, W) banded matrices for the channel-mean map
    sam_ref:  (7, W+6, W) banded matrices for the channel-max map
    w1_ref:   (C, C//r), w2_ref: (C//r, C) channel-attention MLP (no bias)
    pa_ref / pm_ref: (H+6, W+6) f32 VMEM scratch (zero-padded mean / max maps)
    """
    H, W, C = u.shape

    # --- spatial attention: 7x7 conv (pad 3, no bias) over [mean_c, max_c] ---
    pa_ref[...] = jnp.zeros_like(pa_ref)
    pm_ref[...] = jnp.zeros_like(pm_ref)
    pa_ref[3:3 + H, 3:3 + W] = jnp.mean(u, axis=-1)
    pm_ref[3:3 + H, 3:3 + W] = jnp.max(u, axis=-1)

    sa = jnp.zeros((H, W), jnp.float32)
    for kh in range(7):                         # 14 MXU matmuls, no lane shifts
        sa = sa + jnp.dot(pa_ref[kh:kh + H, :], saa_ref[kh],
                          preferred_element_type=jnp.float32)
        sa = sa + jnp.dot(pm_ref[kh:kh + H, :], sam_ref[kh],
                          preferred_element_type=jnp.float32)
    u_sa = u * jax.nn.sigmoid(sa)[:, :, None]

    # --- spectral (channel) attention: shared MLP on global avg & max pool ---
    flat = u_sa.reshape(H * W, C)
    pooled = jnp.concatenate(
        [jnp.sum(flat, axis=0, keepdims=True) * (1.0 / float(H * W)),
         jnp.max(flat, axis=0, keepdims=True)], axis=0)          # (2, C)
    hidden = jnp.maximum(jnp.dot(pooled, w1_ref[...],
                                 preferred_element_type=jnp.float32), 0.0)
    z = jnp.dot(hidden, w2_ref[...], preferred_element_type=jnp.float32)
    att = jax.nn.sigmoid(z[0:1, :] + z[1:2, :])                  # (1, C)
    o_ref[0] = u_sa * att.reshape(1, 1, C)


def _upsample_cbam_kernel(x_ref, wup_ref, saa_ref, sam_ref, w1_ref, w2_ref,
                          o_ref, dil_ref, pa_ref, pm_ref):
    """up_i (f>1, depthwise bilinear ConvTranspose2d) fused with cbam_i.

    The zero-interleaved (dilated) map lives only in VMEM — no f^2-inflated
    HBM round trip.  wup_ref is the spatially-flipped bilinear kernel (K,K,C).
    """
    H, W, C = x_ref.shape[1], x_ref.shape[2], x_ref.shape[3]
    Ho, Wo = o_ref.shape[1], o_ref.shape[2]
    K = wup_ref.shape[0]
    f = K // 2
    pad = K - 1 - f // 2

    x = x_ref[0]
    # zero-interleave by factor f along W then H (3-D concat + reshape only).
    xw = jnp.concatenate(
        [x, jnp.zeros((H, W, (f - 1) * C), jnp.float32)], axis=2
    ).reshape(H, W * f, C)
    xhw = jnp.concatenate(
        [xw, jnp.zeros((H, (f - 1) * W * f, C), jnp.float32)], axis=1
    ).reshape(H * f, W * f, C)

    dil_ref[...] = jnp.zeros_like(dil_ref)
    dil_ref[pad:pad + H * f, pad:pad + W * f, :] = xhw

    up = jnp.zeros((Ho, Wo, C), jnp.float32)
    for kh in range(K):
        for kw in range(K):
            up = up + dil_ref[kh:kh + Ho, kw:kw + Wo, :] * wup_ref[kh, kw, :]

    _cbam_store(up, saa_ref, sam_ref, w1_ref, w2_ref, o_ref, pa_ref, pm_ref)


def _conv1x1_cbam_kernel(x_ref, w_ref, b_ref, saa_ref, sam_ref, w1_ref, w2_ref,
                         o_ref, pa_ref, pm_ref):
    """up_i (f==1, 1x1 conv) fused with cbam_i."""
    H, W, C = x_ref.shape[1], x_ref.shape[2], x_ref.shape[3]
    Cout = o_ref.shape[3]
    u = (jnp.dot(x_ref[0].reshape(H * W, C).astype(w_ref.dtype), w_ref[...],
                 preferred_element_type=jnp.float32)
         + b_ref[0]).reshape(H, W, Cout)
    _cbam_store(u, saa_ref, sam_ref, w1_ref, w2_ref, o_ref, pa_ref, pm_ref)


# ----------------------------------------------------------------------------
# pallas_call wrappers
# ----------------------------------------------------------------------------

_PAR = pltpu.CompilerParams(dimension_semantics=("parallel",))


def conv3x3_bn_relu(x, w, bias, scale, shift):
    B, H, W, Cin = x.shape
    Cout = w.shape[-1]
    return pl.pallas_call(
        _conv3x3_bn_relu_kernel,
        out_shape=jax.ShapeDtypeStruct((B, H, W, Cout), jnp.float32),
        grid=(B,),
        in_specs=[
            pl.BlockSpec((1, H, W, Cin), lambda b: (b, 0, 0, 0)),
            pl.BlockSpec((9 * Cin, Cout), lambda b: (0, 0)),
            pl.BlockSpec((1, Cout), lambda b: (0, 0)),
            pl.BlockSpec((1, Cout), lambda b: (0, 0)),
            pl.BlockSpec((1, Cout), lambda b: (0, 0)),
        ],
        out_specs=pl.BlockSpec((1, H, W, Cout), lambda b: (b, 0, 0, 0)),
        scratch_shapes=[pltpu.VMEM((H + 2, W + 2, Cin), jnp.float32)],
        compiler_params=_PAR,
    )(x, w, bias, scale, shift)


def add_conv3x3_bn_relu(xa, xb, w, bias, scale, shift):
    B, H, W, Cin = xa.shape
    Cout = w.shape[-1]
    return pl.pallas_call(
        _add_conv3x3_bn_relu_kernel,
        out_shape=jax.ShapeDtypeStruct((B, H, W, Cout), jnp.float32),
        grid=(B,),
        in_specs=[
            pl.BlockSpec((1, H, W, Cin), lambda b: (b, 0, 0, 0)),
            pl.BlockSpec((1, H, W, Cin), lambda b: (b, 0, 0, 0)),
            pl.BlockSpec((9 * Cin, Cout), lambda b: (0, 0)),
            pl.BlockSpec((1, Cout), lambda b: (0, 0)),
            pl.BlockSpec((1, Cout), lambda b: (0, 0)),
            pl.BlockSpec((1, Cout), lambda b: (0, 0)),
        ],
        out_specs=pl.BlockSpec((1, H, W, Cout), lambda b: (b, 0, 0, 0)),
        scratch_shapes=[pltpu.VMEM((H + 2, W + 2, Cin), jnp.float32)],
        compiler_params=_PAR,
    )(xa, xb, w, bias, scale, shift)


def _make_sa_band(sa_w, Wo):
    """Turn (7,7,2) spatial-attention conv weights into banded matmul RHS.

    Returns two (7, Wo+6, Wo) matrices A where
      A[kh, wp, w] = sa_w[kh, wp - w, ch]  if 0 <= wp - w < 7 else 0.
    """
    wp = jnp.arange(Wo + 6)[:, None]
    w = jnp.arange(Wo)[None, :]
    d = wp - w
    valid = (d >= 0) & (d < 7)
    dcl = jnp.clip(d, 0, 6)
    band = sa_w[:, dcl, :]                                  # (7, Wo+6, Wo, 2)
    band = jnp.where(valid[None, :, :, None], band, 0.0)
    return band[..., 0], band[..., 1]


def upsample_cbam(x, wup, sa_w, ca_w1, ca_w2, f):
    """Fused depthwise-bilinear upsample (ConvTranspose2d) + CBAM, f > 1."""
    B, H, W, C = x.shape
    K = 2 * f
    pad = K - 1 - f // 2
    Ho = (H - 1) * f - 2 * (f // 2) + K        # PyTorch ConvTranspose2d formula
    Wo = (W - 1) * f - 2 * (f // 2) + K
    Hp2, Wp2 = H * f + 2 * pad, W * f + 2 * pad
    saa, sam = _make_sa_band(sa_w, Wo)
    Cr = ca_w1.shape[-1]
    return pl.pallas_call(
        _upsample_cbam_kernel,
        out_shape=jax.ShapeDtypeStruct((B, Ho, Wo, C), jnp.float32),
        grid=(B,),
        in_specs=[
            pl.BlockSpec((1, H, W, C), lambda b: (b, 0, 0, 0)),
            pl.BlockSpec((K, K, C), lambda b: (0, 0, 0)),
            pl.BlockSpec((7, Wo + 6, Wo), lambda b: (0, 0, 0)),
            pl.BlockSpec((7, Wo + 6, Wo), lambda b: (0, 0, 0)),
            pl.BlockSpec((C, Cr), lambda b: (0, 0)),
            pl.BlockSpec((Cr, C), lambda b: (0, 0)),
        ],
        out_specs=pl.BlockSpec((1, Ho, Wo, C), lambda b: (b, 0, 0, 0)),
        scratch_shapes=[
            pltpu.VMEM((Hp2, Wp2, C), jnp.float32),
            pltpu.VMEM((Ho + 6, Wo + 6), jnp.float32),
            pltpu.VMEM((Ho + 6, Wo + 6), jnp.float32),
        ],
        compiler_params=_PAR,
    )(x, wup, saa, sam, ca_w1, ca_w2)


def conv1x1_cbam(x, w1x1, b1x1, sa_w, ca_w1, ca_w2):
    """Fused 1x1 conv (f == 1 up path) + CBAM."""
    B, H, W, C = x.shape
    Cout = w1x1.shape[-1]
    saa, sam = _make_sa_band(sa_w, W)
    Cr = ca_w1.shape[-1]
    return pl.pallas_call(
        _conv1x1_cbam_kernel,
        out_shape=jax.ShapeDtypeStruct((B, H, W, Cout), jnp.float32),
        grid=(B,),
        in_specs=[
            pl.BlockSpec((1, H, W, C), lambda b: (b, 0, 0, 0)),
            pl.BlockSpec((C, Cout), lambda b: (0, 0)),
            pl.BlockSpec((1, Cout), lambda b: (0, 0)),
            pl.BlockSpec((7, W + 6, W), lambda b: (0, 0, 0)),
            pl.BlockSpec((7, W + 6, W), lambda b: (0, 0, 0)),
            pl.BlockSpec((C, Cr), lambda b: (0, 0)),
            pl.BlockSpec((Cr, C), lambda b: (0, 0)),
        ],
        out_specs=pl.BlockSpec((1, H, W, Cout), lambda b: (b, 0, 0, 0)),
        scratch_shapes=[
            pltpu.VMEM((H + 6, W + 6), jnp.float32),
            pltpu.VMEM((H + 6, W + 6), jnp.float32),
        ],
        compiler_params=_PAR,
    )(x, w1x1, b1x1, saa, sam, ca_w1, ca_w2)


# ----------------------------------------------------------------------------
# TAAS forward
# ----------------------------------------------------------------------------

def taas_forward(features_nchw, params):
    """features_nchw: list of NCHW arrays; returns NCHW (B, 64, H0, W0)."""
    B = features_nchw[0].shape[0]
    H0, W0 = features_nchw[0].shape[2], features_nchw[0].shape[3]
    # torch.zeros((B, 64, H0, W0)) accumulator (NHWC internally).
    output = jnp.zeros((B, H0, W0, 64), jnp.float32)
    for feat, p in zip(features_nchw, params):
        x = jnp.transpose(feat, (0, 2, 3, 1)).astype(jnp.float32)      # NCHW->NHWC
        proj = conv3x3_bn_relu(x, p['proj_w'], p['proj_b'],
                               p['proj_scale'], p['proj_shift'])        # proj_i
        if p['up_factor'] > 1:                                          # up_i+cbam_i
            up = upsample_cbam(proj, p['up_w'], p['sa_w'],
                               p['ca_w1'], p['ca_w2'], p['up_factor'])
        else:
            up = conv1x1_cbam(proj, p['up_w1'], p['up_b1'], p['sa_w'],
                              p['ca_w1'], p['ca_w2'])
        output = add_conv3x3_bn_relu(output, up, p['node_w'], p['node_b'],
                                     p['node_scale'], p['node_shift'])  # node_i
    return jnp.transpose(output, (0, 3, 1, 2))                          # NHWC->NCHW


# ----------------------------------------------------------------------------
# Deterministic parameter initialization
# ----------------------------------------------------------------------------

def _bilinear_upsample_weight(f):
    """fill_up_weights: bilinear kernel of size 2f x 2f (same for all channels)."""
    K = 2 * f
    fc = int(math.ceil(K / 2.0))
    c = (2 * fc - 1 - fc % 2) / (2.0 * fc)
    og = np.arange(K, dtype=np.float64)
    w1 = 1.0 - np.abs(og / fc - c)
    return np.outer(w1, w1).astype(np.float32)


def init_params(key, in_chs, out_ch, up_factors, ratio=16):
    def rnd(k, shape, s=0.1):
        return jax.random.normal(k, shape, jnp.float32) * s

    def bn_fold(keys):
        gamma = 1.0 + rnd(keys[0], (1, out_ch))
        beta = rnd(keys[1], (1, out_ch))
        rmean = rnd(keys[2], (1, out_ch))
        rvar = 1.0 + jnp.abs(rnd(keys[3], (1, out_ch)))
        scale = gamma / jnp.sqrt(rvar + 1e-5)
        shift = beta - rmean * scale
        return scale, shift

    params = []
    for i, (cin, f) in enumerate(zip(in_chs, up_factors)):
        ks = jax.random.split(jax.random.fold_in(key, i), 20)
        p = {'up_factor': int(f)}
        # proj_i: 3x3 conv weights flattened to (9*Cin, Cout), bf16 for the MXU.
        p['proj_w'] = rnd(ks[0], (3, 3, cin, out_ch)).reshape(
            9 * cin, out_ch).astype(jnp.bfloat16)
        p['proj_b'] = rnd(ks[1], (1, out_ch))
        p['proj_scale'], p['proj_shift'] = bn_fold(ks[2:6])
        # up_i
        if f > 1:
            K = 2 * f
            w2d = _bilinear_upsample_weight(int(f))
            w_flip = np.ascontiguousarray(w2d[::-1, ::-1])   # flip for direct conv
            p['up_w'] = jnp.asarray(np.tile(w_flip[:, :, None], (1, 1, out_ch)))
        else:
            p['up_w1'] = rnd(ks[6], (out_ch, out_ch)).astype(jnp.bfloat16)
            p['up_b1'] = rnd(ks[7], (1, out_ch))
        # cbam_i: spatial-attention 7x7x2 conv weights + channel-attention MLP.
        p['sa_w'] = rnd(ks[8], (7, 7, 2))
        cr = max(out_ch // ratio, 1)
        p['ca_w1'] = rnd(ks[9], (out_ch, cr))
        p['ca_w2'] = rnd(ks[10], (cr, out_ch))
        # node_i
        p['node_w'] = rnd(ks[11], (3, 3, out_ch, out_ch)).reshape(
            9 * out_ch, out_ch).astype(jnp.bfloat16)
        p['node_b'] = rnd(ks[12], (1, out_ch))
        p['node_scale'], p['node_shift'] = bn_fold(ks[13:17])
        params.append(p)
    return params


# ----------------------------------------------------------------------------

if __name__ == "__main__":
    key = jax.random.PRNGKey(0)
    kf0, kf1, kp = jax.random.split(key, 3)

    B = 2
    out_ch = 64            # TAAS.forward hard-codes a 64-channel accumulator
    in_chs = [8, 16]
    up_factors = [1, 2]
    H0, W0 = 8, 8

    features = [
        jax.random.normal(kf0, (B, in_chs[0], H0, W0), jnp.float32),
        jax.random.normal(kf1, (B, in_chs[1], H0 // 2, W0 // 2), jnp.float32),
    ]
    params = init_params(kp, in_chs, out_ch, up_factors)

    out = taas_forward(features, params)
    out = jax.block_until_ready(out)

    assert out.shape == (B, out_ch, H0, W0), out.shape
    assert bool(jnp.all(jnp.isfinite(out)))
    print("KERNEL_OK")
</pallas_src>

<mosaic_0001>
module attributes {stable_mosaic.version = 11 : i64} {
  func.func @_conv3x3_bn_relu_kernel(%arg0: i32, %arg1: memref<1x8x8x8xf32, #tpu.memory_space<vmem>>, %arg2: memref<72x64xbf16, #tpu.memory_space<vmem>>, %arg3: memref<1x64xf32, #tpu.memory_space<vmem>>, %arg4: memref<1x64xf32, #tpu.memory_space<vmem>>, %arg5: memref<1x64xf32, #tpu.memory_space<vmem>>, %arg6: memref<1x8x8x64xf32, #tpu.memory_space<vmem>>, %arg7: memref<10x10x8xf32, #tpu.memory_space<vmem>>) attributes {dimension_semantics = [#tpu.dimension_semantics<parallel>], iteration_bounds = array<i64: 2>, scalar_prefetch = 0 : i64, scratch_operands = 1 : i64, tpu.core_type = #tpu.core_type<tc>, window_params = [{transform_indices = @transform_0, window_bounds = array<i64: 1, 8, 8, 8>}, {pipeline_mode = #tpu.pipeline_mode<synchronous>, transform_indices = @transform_1, window_bounds = array<i64: 72, 64>}, {pipeline_mode = #tpu.pipeline_mode<synchronous>, transform_indices = @transform_2, window_bounds = array<i64: 1, 64>}, {pipeline_mode = #tpu.pipeline_mode<synchronous>, transform_indices = @transform_3, window_bounds = array<i64: 1, 64>}, {pipeline_mode = #tpu.pipeline_mode<synchronous>, transform_indices = @transform_4, window_bounds = array<i64: 1, 64>}, {transform_indices = @transform_5, window_bounds = array<i64: 1, 8, 8, 64>}]} {
    %cst = arith.constant 0.000000e+00 : f32
    %0 = vector.broadcast %cst : f32 to vector<10x10x8xf32>
    %c0 = arith.constant 0 : index
    %c0_0 = arith.constant 0 : index
    %c0_1 = arith.constant 0 : index
    %1 = vector.load %arg7[%c0, %c0_0, %c0_1] : memref<10x10x8xf32, #tpu.memory_space<vmem>>, vector<10x10x8xf32>
    tpu.vector_store %arg7[%c0, %c0_0, %c0_1], %0 {strides = array<i32>} : memref<10x10x8xf32, #tpu.memory_space<vmem>>, vector<10x10x8xf32>,
    %c0_2 = arith.constant 0 : index
    %c0_3 = arith.constant 0 : index
    %c0_4 = arith.constant 0 : index
    %c0_5 = arith.constant 0 : index
    %2 = vector.load %arg1[%c0_2, %c0_3, %c0_4, %c0_5] : memref<1x8x8x8xf32, #tpu.memory_space<vmem>>, vector<1x8x8x8xf32>
    %3 = vector.shape_cast %2 : vector<1x8x8x8xf32> to vector<8x8x8xf32>
    %c1 = arith.constant 1 : index
    %c1_6 = arith.constant 1 : index
    %c0_7 = arith.constant 0 : index
    %4 = vector.load %arg7[%c1, %c1_6, %c0_7] : memref<10x10x8xf32, #tpu.memory_space<vmem>>, vector<8x8x8xf32>
    tpu.vector_store %arg7[%c1, %c1_6, %c0_7], %3 {strides = array<i32>} : memref<10x10x8xf32, #tpu.memory_space<vmem>>, vector<8x8x8xf32>,
    %c0_8 = arith.constant 0 : index
    %c0_9 = arith.constant 0 : index
    %c0_10 = arith.constant 0 : index
    %5 = vector.load %arg7[%c0_8, %c0_9, %c0_10] : memref<10x10x8xf32, #tpu.memory_space<vmem>>, vector<8x8x8xf32>
    %6 = vector.shape_cast %5 : vector<8x8x8xf32> to vector<64x8xf32>
    %c0_11 = arith.constant 0 : index
    %c1_12 = arith.constant 1 : index
    %c0_13 = arith.constant 0 : index
    %7 = vector.load %arg7[%c0_11, %c1_12, %c0_13] : memref<10x10x8xf32, #tpu.memory_space<vmem>>, vector<8x8x8xf32>
    %8 = vector.shape_cast %7 : vector<8x8x8xf32> to vector<64x8xf32>
    %c0_14 = arith.constant 0 : index
    %c2 = arith.constant 2 : index
    %c0_15 = arith.constant 0 : index
    %9 = vector.load %arg7[%c0_14, %c2, %c0_15] : memref<10x10x8xf32, #tpu.memory_space<vmem>>, vector<8x8x8xf32>
    %10 = vector.shape_cast %9 : vector<8x8x8xf32> to vector<64x8xf32>
    %c1_16 = arith.constant 1 : index
    %c0_17 = arith.constant 0 : index
    %c0_18 = arith.constant 0 : index
    %11 = vector.load %arg7[%c1_16, %c0_17, %c0_18] : memref<10x10x8xf32, #tpu.memory_space<vmem>>, vector<8x8x8xf32>
    %12 = vector.shape_cast %11 : vector<8x8x8xf32> to vector<64x8xf32>
    %c1_19 = arith.constant 1 : index
    %c1_20 = arith.constant 1 : index
    %c0_21 = arith.constant 0 : index
    %13 = vector.load %arg7[%c1_19, %c1_20, %c0_21] : memref<10x10x8xf32, #tpu.memory_space<vmem>>, vector<8x8x8xf32>
    %14 = vector.shape_cast %13 : vector<8x8x8xf32> to vector<64x8xf32>
    %c1_22 = arith.constant 1 : index
    %c2_23 = arith.constant 2 : index
    %c0_24 = arith.constant 0 : index
    %15 = vector.load %arg7[%c1_22, %c2_23, %c0_24] : memref<10x10x8xf32, #tpu.memory_space<vmem>>, vector<8x8x8xf32>
    %16 = vector.shape_cast %15 : vector<8x8x8xf32> to vector<64x8xf32>
    %c2_25 = arith.constant 2 : index
    %c0_26 = arith.constant 0 : index
    %c0_27 = arith.constant 0 : index
    %17 = vector.load %arg7[%c2_25, %c0_26, %c0_27] : memref<10x10x8xf32, #tpu.memory_space<vmem>>, vector<8x8x8xf32>
    %18 = vector.shape_cast %17 : vector<8x8x8xf32> to vector<64x8xf32>
    %c2_28 = arith.constant 2 : index
    %c1_29 = arith.constant 1 : index
    %c0_30 = arith.constant 0 : index
    %19 = vector.load %arg7[%c2_28, %c1_29, %c0_30] : memref<10x10x8xf32, #tpu.memory_space<vmem>>, vector<8x8x8xf32>
    %20 = vector.shape_cast %19 : vector<8x8x8xf32> to vector<64x8xf32>
    %c2_31 = arith.constant 2 : index
    %c2_32 = arith.constant 2 : index
    %c0_33 = arith.constant 0 : index
    %21 = vector.load %arg7[%c2_31, %c2_32, %c0_33] : memref<10x10x8xf32, #tpu.memory_space<vmem>>, vector<8x8x8xf32>
    %22 = vector.shape_cast %21 : vector<8x8x8xf32> to vector<64x8xf32>
    %23 = tpu.concatenate %6, %8, %10, %12, %14, %16, %18, %20, %22 in 1 : vector<64x8xf32>, vector<64x8xf32>, vector<64x8xf32>, vector<64x8xf32>, vector<64x8xf32>, vector<64x8xf32>, vector<64x8xf32>, vector<64x8xf32>, vector<64x8xf32> -> vector<64x72xf32>
    %24 = arith.truncf %23 : vector<64x72xf32> to vector<64x72xbf16>
    %c0_34 = arith.constant 0 : index
    %c0_35 = arith.constant 0 : index
    %25 = vector.load %arg2[%c0_34, %c0_35] : memref<72x64xbf16, #tpu.memory_space<vmem>>, vector<72x64xbf16>
    %cst_36 = arith.constant dense<0.000000e+00> : vector<64x64xf32>
    %26 = tpu.matmul %24, %25, %cst_36 {dimension_numbers = #tpu.dot_dimension_numbers<[1], [0], [0], [1], [0, 0, 1, 1], [], []>} : vector<64x72xbf16>, vector<72x64xbf16>, vector<64x64xf32> -> vector<64x64xf32>
    %c0_37 = arith.constant 0 : index
    %c0_38 = arith.constant 0 : index
    %27 = vector.load %arg3[%c0_37, %c0_38] : memref<1x64xf32, #tpu.memory_space<vmem>>, vector<1x64xf32>
    %28 = vector.shape_cast %27 : vector<1x64xf32> to vector<64xf32>
    %29 = vector.shape_cast %28 : vector<64xf32> to vector<1x64xf32>
    %30 = vector.broadcast %29 : vector<1x64xf32> to vector<64x64xf32>
    %31 = arith.addf %26, %30 : vector<64x64xf32>
    %c0_39 = arith.constant 0 : index
    %c0_40 = arith.constant 0 : index
    %32 = vector.load %arg4[%c0_39, %c0_40] : memref<1x64xf32, #tpu.memory_space<vmem>>, vector<1x64xf32>
    %33 = vector.shape_cast %32 : vector<1x64xf32> to vector<64xf32>
    %34 = vector.shape_cast %33 : vector<64xf32> to vector<1x64xf32>
    %35 = vector.broadcast %34 : vector<1x64xf32> to vector<64x64xf32>
    %36 = arith.mulf %31, %35 : vector<64x64xf32>
    %c0_41 = arith.constant 0 : index
    %c0_42 = arith.constant 0 : index
    %37 = vector.load %arg5[%c0_41, %c0_42] : memref<1x64xf32, #tpu.memory_space<vmem>>, vector<1x64xf32>
    %38 = vector.shape_cast %37 : vector<1x64xf32> to vector<64xf32>
    %39 = vector.shape_cast %38 : vector<64xf32> to vector<1x64xf32>
    %40 = vector.broadcast %39 : vector<1x64xf32> to vector<64x64xf32>
    %41 = arith.addf %36, %40 : vector<64x64xf32>
    %cst_43 = arith.constant 0.000000e+00 : f32
    %42 = vector.broadcast %cst_43 : f32 to vector<64x64xf32>
    %43 = arith.maximumf %41, %42 : vector<64x64xf32>
    %44 = vector.shape_cast %43 : vector<64x64xf32> to vector<8x8x64xf32>
    %c0_44 = arith.constant 0 : index
    %c0_45 = arith.constant 0 : index
    %c0_46 = arith.constant 0 : index
    %c0_47 = arith.constant 0 : index
    %45 = vector.load %arg6[%c0_44, %c0_45, %c0_46, %c0_47] : memref<1x8x8x64xf32, #tpu.memory_space<vmem>>, vector<1x8x8x64xf32>
    %46 = vector.shape_cast %45 : vector<1x8x8x64xf32> to vector<8x8x64xf32>
    %47 = vector.shape_cast %44 : vector<8x8x64xf32> to vector<1x8x8x64xf32>
    tpu.vector_store %arg6[%c0_44, %c0_45, %c0_46, %c0_47], %47 {strides = array<i32>} : memref<1x8x8x64xf32, #tpu.memory_space<vmem>>, vector<1x8x8x64xf32>,
    return
  }
  func.func @transform_0(%arg0: i32) -> (i32, i32, i32, i32) {
    %c0_i32 = arith.constant 0 : i32
    %c0_i32_0 = arith.constant 0 : i32
    %c0_i32_1 = arith.constant 0 : i32
    %c0_i32_2 = arith.constant 0 : i32
    return %arg0, %c0_i32, %c0_i32_0, %c0_i32_1 : i32, i32, i32, i32
  }
  func.func @transform_1(%arg0: i32) -> (i32, i32) {
    %c0_i32 = arith.constant 0 : i32
    %c0_i32_0 = arith.constant 0 : i32
    %c0_i32_1 = arith.constant 0 : i32
    return %c0_i32, %c0_i32_0 : i32, i32
  }
  func.func @transform_2(%arg0: i32) -> (i32, i32) {
    %c0_i32 = arith.constant 0 : i32
    %c0_i32_0 = arith.constant 0 : i32
    %c0_i32_1 = arith.constant 0 : i32
    return %c0_i32, %c0_i32_0 : i32, i32
  }
  func.func @transform_3(%arg0: i32) -> (i32, i32) {
    %c0_i32 = arith.constant 0 : i32
    %c0_i32_0 = arith.constant 0 : i32
    %c0_i32_1 = arith.constant 0 : i32
    return %c0_i32, %c0_i32_0 : i32, i32
  }
  func.func @transform_4(%arg0: i32) -> (i32, i32) {
    %c0_i32 = arith.constant 0 : i32
    %c0_i32_0 = arith.constant 0 : i32
    %c0_i32_1 = arith.constant 0 : i32
    return %c0_i32, %c0_i32_0 : i32, i32
  }
  func.func @transform_5(%arg0: i32) -> (i32, i32, i32, i32) {
    %c0_i32 = arith.constant 0 : i32
    %c0_i32_0 = arith.constant 0 : i32
    %c0_i32_1 = arith.constant 0 : i32
    %c0_i32_2 = arith.constant 0 : i32
    return %arg0, %c0_i32, %c0_i32_0, %c0_i32_1 : i32, i32, i32, i32
  }
}

</mosaic_0001>

<llo_original>
// kernel: tpu_custom_call.1
$region0: #{tpu_custom_call.1}
  #allocation0 [shape = 'u32[]', space=smem, size = 0x4, offset = 0x4, fixed_abs, tag = 'smem constant byte address 0x4 - core index']
  #allocation1 [shape = 'u32[144,128]{1,0:T(1,128)}', space=vmem, size = 0x12000, scoped, tag = 'internal scratch']
  #allocation2 [shape = 'f32[10,10,8]{2,1,0:T(8,128)}', space=vmem, size = 0x14000, scoped, tag = 'scratch operand']
  %s0 = inlined_call_operand.hbm [shape: f32[2,8,8,8], index: 0, kind: input, shape index: {}]
  %s1 = inlined_call_operand.vmem [shape: bf16[72,64], index: 1, kind: input, shape index: {}]
  %s2 = inlined_call_operand.vmem [shape: f32[1,64], index: 2, kind: input, shape index: {}]
  %s3 = inlined_call_operand.vmem [shape: f32[1,64], index: 3, kind: input, shape index: {}]
  %s4 = inlined_call_operand.vmem [shape: f32[1,64], index: 4, kind: input, shape index: {}]
  %s5 = inlined_call_operand.hbm [shape: f32[2,8,8,64], index: 5, kind: output, shape index: {}]
  %s6 = sld [smem:[#allocation0]]
  $region57: #{tpu_custom_call.1} parent=0
    _
  %s8 = ssub.s32 1, %s6
  %s9 = scalar_select 0, %s8, %s6
  $region1: #{tpu_custom_call.1} parent=0
    #allocation3 [shape = 'u8[65536]{0}', space=vmem, size = 0x10000, scoped, tag = 'input window, operand 0']
    #allocation4 [shape = 's32[2]{0}', space=sflag, size = 0x8, scoped, tag = 'scoped memory for tpu_custom_call.1']
    #allocation5 [shape = 's32[2]{0}', space=sflag, size = 0x8, scoped, tag = 'scoped memory for tpu_custom_call.1']
    #allocation6 [shape = 'u8[65536]{0}', space=vmem, size = 0x10000, scoped, tag = 'output window, operand 0']
    %10 = vsyncpa [#allocation4], 0
    %s11 = scalar_lea.sflag [#allocation4], 1
    %12 = vsyncpa %s11, 0
    %13 = vsyncpa [#allocation5], 0
    %s14 = scalar_lea.sflag [#allocation5], 1
    %15 = vsyncpa %s14, 0
    loop: start=0, step=1, limit=4
    $region2: #{tpu_custom_call.1} parent=1 // loop_pre_header
      _
    $region3: #{tpu_custom_call.1} parent=1 // loop_header
      %s17 = sphi 0, %s21
      %p18 = scmp.ge.s32.totalorder %s17, 4
      %s27 = sphi 0, %s29
      %s30 = sphi 0, %s27
      %s31 = sphi 0, %s30
      %s47 = sphi 0, %s31
      %s51 = sphi 0, %s51
      %s53 = sphi 0, %s51
      %s54 = sphi 0, %s53
      %s68 = sphi 0, %s54
      %s72 = sphi 0, %s72
      %s74 = sphi 0, %s72
      %s75 = sphi 0, %s74
      %s89 = sphi 0, %s75
      %s93 = sphi 0, %s93
      %s95 = sphi 0, %s93
      %s96 = sphi 0, %s95
      %s110 = sphi 0, %s96
      %s114 = sphi 0, %s114
      %s116 = sphi 0, %s114
      %s117 = sphi 0, %s116
      %s131 = sphi 0, %s117
      %s137 = sphi 0, %s139
      %s140 = sphi 0, %s137
      %s141 = sphi 0, %s140
      %s157 = sphi 0, %s141
    $region4: #{tpu_custom_call.1} parent=1 // loop_header_branch
      %20 = sbr.rel (%p18) target = $region8
    $region5: #{tpu_custom_call.1} parent=1 // loop_body
      %s22 = ssub.s32 %s17, 1
      %s23 = ssub.s32 %s17, 2
      %s24 = sadd.s32 %s17, 1
      %s25 = ssub.s32 %s17, %s24
      %p26 = scmp.eq.s32.totalorder %s25, 0
      %s28 = sadd.s32 %s27, 1
      %s29 = scalar_select %p26, %s27, %s28
      %p32 = pneg %p26
      %p33 = scmp.eq.s32.totalorder %s17, 1
      %p34 = por %p32, %p33
      %p35 = scmp.ne.s32.totalorder %s27, %s30
      %p36 = scmp.eq.s32.totalorder %s17, 0
      %p37 = por %p35, %p36
      %p38 = scmp.ne.s32.totalorder %s27, %s30
      %p39 = scmp.eq.s32.totalorder %s22, 1
      %p40 = por %p38, %p39
      %p41 = scmp.ne.s32.totalorder %s30, %s31
      %p42 = scmp.eq.s32.totalorder %s22, 0
      %p43 = por %p41, %p42
      %p44 = scmp.ne.s32.totalorder %s30, %s31
      %p45 = scmp.eq.s32.totalorder %s23, 1
      %p46 = por %p44, %p45
      %p48 = scmp.ne.s32.totalorder %s31, %s47
      %p49 = scmp.eq.s32.totalorder %s23, 0
      %p50 = por %p48, %p49
      %s52 = sadd.s32 %s51, 1
      %p55 = scmp.eq.s32.totalorder %s17, 1
      %p56 = scmp.ne.s32.totalorder %s51, %s53
      %p57 = scmp.eq.s32.totalorder %s17, 0
      %p58 = por %p56, %p57
      %p59 = scmp.ne.s32.totalorder %s51, %s53
      %p60 = scmp.eq.s32.totalorder %s22, 1
      %p61 = por %p59, %p60
      %p62 = scmp.ne.s32.totalorder %s53, %s54
      %p63 = scmp.eq.s32.totalorder %s22, 0
      %p64 = por %p62, %p63
      %p65 = scmp.ne.s32.totalorder %s53, %s54
      %p66 = scmp.eq.s32.totalorder %s23, 1
      %p67 = por %p65, %p66
      %p69 = scmp.ne.s32.totalorder %s54, %s68
      %p70 = scmp.eq.s32.totalorder %s23, 0
      %p71 = por %p69, %p70
      %s73 = sadd.s32 %s72, 1
      %p76 = scmp.eq.s32.totalorder %s17, 1
      %p77 = scmp.ne.s32.totalorder %s72, %s74
      %p78 = scmp.eq.s32.totalorder %s17, 0
      %p79 = por %p77, %p78
      %p80 = scmp.ne.s32.totalorder %s72, %s74
      %p81 = scmp.eq.s32.totalorder %s22, 1
      %p82 = por %p80, %p81
      %p83 = scmp.ne.s32.totalorder %s74, %s75
      %p84 = scmp.eq.s32.totalorder %s22, 0
      %p85 = por %p83, %p84
      %p86 = scmp.ne.s32.totalorder %s74, %s75
      %p87 = scmp.eq.s32.totalorder %s23, 1
      %p88 = por %p86, %p87
      %p90 = scmp.ne.s32.totalorder %s75, %s89
      %p91 = scmp.eq.s32.totalorder %s23, 0
      %p92 = por %p90, %p91
      %s94 = sadd.s32 %s93, 1
      %p97 = scmp.eq.s32.totalorder %s17, 1
      %p98 = scmp.ne.s32.totalorder %s93, %s95
      %p99 = scmp.eq.s32.totalorder %s17, 0
      %p100 = por %p98, %p99
      %p101 = scmp.ne.s32.totalorder %s93, %s95
      %p102 = scmp.eq.s32.totalorder %s22, 1
      %p103 = por %p101, %p102
      %p104 = scmp.ne.s32.totalorder %s95, %s96
      %p105 = scmp.eq.s32.totalorder %s22, 0
      %p106 = por %p104, %p105
      %p107 = scmp.ne.s32.totalorder %s95, %s96
      %p108 = scmp.eq.s32.totalorder %s23, 1
      %p109 = por %p107, %p108
      %p111 = scmp.ne.s32.totalorder %s96, %s110
      %p112 = scmp.eq.s32.totalorder %s23, 0
      %p113 = por %p111, %p112
      %s115 = sadd.s32 %s114, 1
      %p118 = scmp.eq.s32.totalorder %s17, 1
      %p119 = scmp.ne.s32.totalorder %s114, %s116
      %p120 = scmp.eq.s32.totalorder %s17, 0
      %p121 = por %p119, %p120
      %p122 = scmp.ne.s32.totalorder %s114, %s116
      %p123 = scmp.eq.s32.totalorder %s22, 1
      %p124 = por %p122, %p123
      %p125 = scmp.ne.s32.totalorder %s116, %s117
      %p126 = scmp.eq.s32.totalorder %s22, 0
      %p127 = por %p125, %p126
      %p128 = scmp.ne.s32.totalorder %s116, %s117
      %p129 = scmp.eq.s32.totalorder %s23, 1
      %p130 = por %p128, %p129
      %p132 = scmp.ne.s32.totalorder %s117, %s131
      %p133 = scmp.eq.s32.totalorder %s23, 0
      %p134 = por %p132, %p133
      %s135 = ssub.s32 %s17, %s24
      %p136 = scmp.eq.s32.totalorder %s135, 0
      %s138 = sadd.s32 %s137, 1
      %s139 = scalar_select %p136, %s137, %s138
      %p142 = pneg %p136
      %p143 = scmp.eq.s32.totalorder %s17, 1
      %p144 = por %p142, %p143
      %p145 = scmp.ne.s32.totalorder %s137, %s140
      %p146 = scmp.eq.s32.totalorder %s17, 0
      %p147 = por %p145, %p146
      %p148 = scmp.ne.s32.totalorder %s137, %s140
      %p149 = scmp.eq.s32.totalorder %s22, 1
      %p150 = por %p148, %p149
      %p151 = scmp.ne.s32.totalorder %s140, %s141
      %p152 = scmp.eq.s32.totalorder %s22, 0
      %p153 = por %p151, %p152
      %p154 = scmp.ne.s32.totalorder %s140, %s141
      %p155 = scmp.eq.s32.totalorder %s23, 1
      %p156 = por %p154, %p155
      %p158 = scmp.ne.s32.totalorder %s141, %s157
      %p159 = scmp.eq.s32.totalorder %s23, 0
      %p160 = por %p158, %p159
      %p161 = scmp.le.s32.totalorder 1, %s17
      %p162 = scmp.lt.s32.totalorder %s17, 3
      %p163 = pnand %p161, %p162
      %p164 = pneg %p163
      // Predicated region
      $region9: #{tpu_custom_call.1} parent=5 // pred_check
        _
      $region10: #{tpu_custom_call.1} parent=5 // pred_check_branch
        %166 = sbr.rel (%p163) target = $region12
      $region11: #{tpu_custom_call.1} parent=5 // pred_region
        %s167 = ssub.s32 %s17, 1
        // Predicated region
        $region13: #{tpu_custom_call.1} parent=11 // pred_check
          %p168 = pneg %p64
        $region14: #{tpu_custom_call.1} parent=11 // pred_check_branch
          %170 = sbr.rel (%p168) target = $region16
        $region15: #{tpu_custom_call.1} parent=11 // pred_region
          _
        $region16: #{tpu_custom_call.1} parent=11 // pred_fallthru
          _
        // Predicated region
        $region17: #{tpu_custom_call.1} parent=11 // pred_check
          %p171 = pneg %p85
        $region18: #{tpu_custom_call.1} parent=11 // pred_check_branch
          %173 = sbr.rel (%p171) target = $region20
        $region19: #{tpu_custom_call.1} parent=11 // pred_region
          _
        $region20: #{tpu_custom_call.1} parent=11 // pred_fallthru
          _
        // Predicated region
        $region21: #{tpu_custom_call.1} parent=11 // pred_check
          %p174 = pneg %p106
        $region22: #{tpu_custom_call.1} parent=11 // pred_check_branch
          %176 = sbr.rel (%p174) target = $region24
        $region23: #{tpu_custom_call.1} parent=11 // pred_region
          _
        $region24: #{tpu_custom_call.1} parent=11 // pred_fallthru
          _
        // Predicated region
        $region25: #{tpu_custom_call.1} parent=11 // pred_check
          %p177 = pneg %p127
        $region26: #{tpu_custom_call.1} parent=11 // pred_check_branch
          %179 = sbr.rel (%p177) target = $region28
        $region27: #{tpu_custom_call.1} parent=11 // pred_region
          _
        $region28: #{tpu_custom_call.1} parent=11 // pred_fallthru
          _
      $region12: #{tpu_custom_call.1} parent=5 // pred_fallthru
        _
      %p180 = scmp.lt.s32.totalorder %s17, 2
      // Predicated region
      $region29: #{tpu_custom_call.1} parent=5 // pred_check
        %p181 = pneg %p180
      $region30: #{tpu_custom_call.1} parent=5 // pred_check_branch
        %183 = sbr.rel (%p181) target = $region32
      $region31: #{tpu_custom_call.1} parent=5 // pred_region
        // Predicated region
        $region33: #{tpu_custom_call.1} parent=31 // pred_check
          %p184 = pneg %p37
        $region34: #{tpu_custom_call.1} parent=31 // pred_check_branch
          %186 = sbr.rel (%p184) target = $region36
        $region35: #{tpu_custom_call.1} parent=31 // pred_region
          %s187 = sand.u32 %s27, 1
          %s188 = scalar_lea.sflag [#allocation4], %s187
          %s189 = sand.u32 %s27, 1
          %s190 = smul.addr %s189, 64
          %s191 = scalar_lea.vmem [#allocation3], %s190
          %s193 = ssub.s32 1024, 1024
          %194 = vsyncadd %s188, %s193
          %s195 = smul.addr %s17, 8
          %s196 = smul.addr %s195, 128
          %s197 = scalar_lea.hbm %s0, %s196
          %s198 = sshll.u32 %s191, 4
          %s199 = int_to_ptr.vmem [resolvable:$true] %s198
          %204 = dma.hbm_to_vmem [thread:$0]  %s197, 1024, %s199, %s188, 128, 128, 8
        $region36: #{tpu_custom_call.1} parent=31 // pred_fallthru
          _
      $region32: #{tpu_custom_call.1} parent=5 // pred_fallthru
        _
      %p205 = scmp.le.s32.totalorder 1, %s17
      %p206 = scmp.lt.s32.totalorder %s17, 3
      %p207 = pnand %p205, %p206
      %p208 = pneg %p207
      // Predicated region
      $region37: #{tpu_custom_call.1} parent=5 // pred_check
        _
      $region38: #{tpu_custom_call.1} parent=5 // pred_check_branch
        %210 = sbr.rel (%p207) target = $region40
      $region39: #{tpu_custom_call.1} parent=5 // pred_region
        %s211 = ssub.s32 %s17, 1
        %s212 = sand.u32 %s30, 1
        %s213 = scalar_lea.sflag [#allocation4], %s212
        %s214 = sand.u32 %s30, 1
        %s215 = smul.addr %s214, 64
        %s216 = scalar_lea.vmem [#allocation3], %s215
        // Predicated region
        $region41: #{tpu_custom_call.1} parent=39 // pred_check
          %p217 = pneg %p43
        $region42: #{tpu_custom_call.1} parent=39 // pred_check_branch
          %219 = sbr.rel (%p217) target = $region44
        $region43: #{tpu_custom_call.1} parent=39 // pred_region
          %220 = dma.done %s213, 1024
        $region44: #{tpu_custom_call.1} parent=39 // pred_fallthru
          _
        %s221 = sand.u32 %s30, 1
        %s222 = scalar_lea.sflag [#allocation4], %s221
        %s223 = sand.u32 %s30, 1
        %s224 = smul.addr %s223, 64
        %s225 = scalar_lea.vmem [#allocation3], %s224
        %p226 = pneg %p43
        %p227 = pneg %p40
        %p228 = pneg %p64
        %p229 = pneg %p61
        %p230 = pneg %p85
        %p231 = pneg %p82
        %p232 = pneg %p106
        %p233 = pneg %p103
        %p234 = pneg %p127
        %p235 = pneg %p124
        %p236 = pneg %p153
        %p237 = pneg %p150
        %s238 = sand.u32 %s140, 1
        %s239 = scalar_lea.sflag [#allocation5], %s238
        %s240 = sand.u32 %s140, 1
        %s241 = smul.addr %s240, 64
        %s242 = scalar_lea.vmem [#allocation6], %s241
        %vm244 = vcmask 64512
        %245 = vst.msk [vmem:[#allocation2] sm:$0xff] %vm244, 0.0
        %vm246 = vcmask 58368
        %247 = vst.msk [vmem:[#allocation2 + $0x8] sm:$0x3] %vm246, 0.0
        %248 = vst.msk [vmem:[#allocation2 + $0x10] sm:$0xff] %vm244, 0.0
        %249 = vst.msk [vmem:[#allocation2 + $0x18] sm:$0x3] %vm246, 0.0
        %250 = vst.msk [vmem:[#allocation2 + $0x20] sm:$0xff] %vm244, 0.0
        %251 = vst.msk [vmem:[#allocation2 + $0x28] sm:$0x3] %vm246, 0.0
        %252 = vst.msk [vmem:[#allocation2 + $0x30] sm:$0xff] %vm244, 0.0
        %253 = vst.msk [vmem:[#allocation2 + $0x38] sm:$0x3] %vm246, 0.0
        %254 = vst.msk [vmem:[#allocation2 + $0x40] sm:$0xff] %vm244, 0.0
        %255 = vst.msk [vmem:[#allocation2 + $0x48] sm:$0x3] %vm246, 0.0
        %256 = vst.msk [vmem:[#allocation2 + $0x50] sm:$0xff] %vm244, 0.0
        %257 = vst.msk [vmem:[#allocation2 + $0x58] sm:$0x3] %vm246, 0.0
        %258 = vst.msk [vmem:[#allocation2 + $0x60] sm:$0xff] %vm244, 0.0
        %259 = vst.msk [vmem:[#allocation2 + $0x68] sm:$0x3] %vm246, 0.0
        %260 = vst.msk [vmem:[#allocation2 + $0x70] sm:$0xff] %vm244, 0.0
        %261 = vst.msk [vmem:[#allocation2 + $0x78] sm:$0x3] %vm246, 0.0
        %262 = vst.msk [vmem:[#allocation2 + $0x80] sm:$0xff] %vm244, 0.0
        %263 = vst.msk [vmem:[#allocation2 + $0x88] sm:$0x3] %vm246, 0.0
        %264 = vst.msk [vmem:[#allocation2 + $0x90] sm:$0xff] %vm244, 0.0
        %265 = vst.msk [vmem:[#allocation2 + $0x98] sm:$0x3] %vm246, 0.0
        %v266 = vld [vmem:[%s216] sm:$0xff]
        %v267 = vld [vmem:[%s216 + $0x8] sm:$0xff]
        %v268 = vld [vmem:[%s216 + $0x10] sm:$0xff]
        %v269 = vld [vmem:[%s216 + $0x18] sm:$0xff]
        %v270 = vld [vmem:[%s216 + $0x20] sm:$0xff]
        %v271 = vld [vmem:[%s216 + $0x28] sm:$0xff]
        %v272 = vld [vmem:[%s216 + $0x30] sm:$0xff]
        %v273 = vld [vmem:[%s216 + $0x38] sm:$0xff]
        %s274 = scalar_lea.vmem [#allocation2], 16
        %275 = vst.msk [vmem:[%s274 + $0x1] sm:$0xff] %vm244, %v266
        %276 = vst.msk [vmem:[%s274 + $0x11] sm:$0xff] %vm244, %v267
        %277 = vst.msk [vmem:[%s274 + $0x21] sm:$0xff] %vm244, %v268
        %278 = vst.msk [vmem:[%s274 + $0x31] sm:$0xff] %vm244, %v269
        %279 = vst.msk [vmem:[%s274 + $0x41] sm:$0xff] %vm244, %v270
        %280 = vst.msk [vmem:[%s274 + $0x51] sm:$0xff] %vm244, %v271
        %281 = vst.msk [vmem:[%s274 + $0x61] sm:$0xff] %vm244, %v272
        %282 = vst.msk [vmem:[%s274 + $0x71] sm:$0xff] %vm244, %v273
        %v283 = vld [vmem:[#allocation2] sm:$0xff]
        %v284 = vld [vmem:[#allocation2 + $0x10] sm:$0xff]
        %v285 = vld [vmem:[#allocation2 + $0x20] sm:$0xff]
        %v286 = vld [vmem:[#allocation2 + $0x30] sm:$0xff]
        %v287 = vld [vmem:[#allocation2 + $0x40] sm:$0xff]
        %v288 = vld [vmem:[#allocation2 + $0x50] sm:$0xff]
        %v289 = vld [vmem:[#allocation2 + $0x60] sm:$0xff]
        %v290 = vld [vmem:[#allocation2 + $0x70] sm:$0xff]
        %v291 = vld [vmem:[#allocation2 + $0x1] sm:$0xff]
        %v292 = vld [vmem:[#allocation2 + $0x11] sm:$0xff]
        %v293 = vld [vmem:[#allocation2 + $0x21] sm:$0xff]
        %v294 = vld [vmem:[#allocation2 + $0x31] sm:$0xff]
        %v295 = vld [vmem:[#allocation2 + $0x41] sm:$0xff]
        %v296 = vld [vmem:[#allocation2 + $0x51] sm:$0xff]
        %v297 = vld [vmem:[#allocation2 + $0x61] sm:$0xff]
        %v298 = vld [vmem:[#allocation2 + $0x71] sm:$0xff]
        %v299 = vld [vmem:[#allocation2 + $0x2] sm:$0xff]
        %v300 = vld [vmem:[#allocation2 + $0x12] sm:$0xff]
        %v301 = vld [vmem:[#allocation2 + $0x22] sm:$0xff]
        %v302 = vld [vmem:[#allocation2 + $0x32] sm:$0xff]
        %v303 = vld [vmem:[#allocation2 + $0x42] sm:$0xff]
        %v304 = vld [vmem:[#allocation2 + $0x52] sm:$0xff]
        %v305 = vld [vmem:[#allocation2 + $0x62] sm:$0xff]
        %v306 = vld [vmem:[#allocation2 + $0x72] sm:$0xff]
        %v307 = vld [vmem:[%s274] sm:$0xff]
        %v308 = vld [vmem:[%s274 + $0x10] sm:$0xff]
        %v309 = vld [vmem:[%s274 + $0x20] sm:$0xff]
        %v310 = vld [vmem:[%s274 + $0x30] sm:$0xff]
        %v311 = vld [vmem:[%s274 + $0x40] sm:$0xff]
        %v312 = vld [vmem:[%s274 + $0x50] sm:$0xff]
        %v313 = vld [vmem:[%s274 + $0x60] sm:$0xff]
        %v314 = vld [vmem:[%s274 + $0x70] sm:$0xff]
        %v315 = vld [vmem:[%s274 + $0x1] sm:$0xff]
        %v316 = vld [vmem:[%s274 + $0x11] sm:$0xff]
        %v317 = vld [vmem:[%s274 + $0x21] sm:$0xff]
        %v318 = vld [vmem:[%s274 + $0x31] sm:$0xff]
        %v319 = vld [vmem:[%s274 + $0x41] sm:$0xff]
        %v320 = vld [vmem:[%s274 + $0x51] sm:$0xff]
        %v321 = vld [vmem:[%s274 + $0x61] sm:$0xff]
        %v322 = vld [vmem:[%s274 + $0x71] sm:$0xff]
        %v323 = vld [vmem:[%s274 + $0x2] sm:$0xff]
        %v324 = vld [vmem:[%s274 + $0x12] sm:$0xff]
        %v325 = vld [vmem:[%s274 + $0x22] sm:$0xff]
        %v326 = vld [vmem:[%s274 + $0x32] sm:$0xff]
        %v327 = vld [vmem:[%s274 + $0x42] sm:$0xff]
        %v328 = vld [vmem:[%s274 + $0x52] sm:$0xff]
        %v329 = vld [vmem:[%s274 + $0x62] sm:$0xff]
        %v330 = vld [vmem:[%s274 + $0x72] sm:$0xff]
        %s331 = scalar_lea.vmem [#allocation2], 32
        %v332 = vld [vmem:[%s331] sm:$0xff]
        %v333 = vld [vmem:[%s331 + $0x10] sm:$0xff]
        %v334 = vld [vmem:[%s331 + $0x20] sm:$0xff]
        %v335 = vld [vmem:[%s331 + $0x30] sm:$0xff]
        %v336 = vld [vmem:[%s331 + $0x40] sm:$0xff]
        %v337 = vld [vmem:[%s331 + $0x50] sm:$0xff]
        %v338 = vld [vmem:[%s331 + $0x60] sm:$0xff]
        %v339 = vld [vmem:[%s331 + $0x70] sm:$0xff]
        %v340 = vld [vmem:[%s331 + $0x1] sm:$0xff]
        %v341 = vld [vmem:[%s331 + $0x11] sm:$0xff]
        %v342 = vld [vmem:[%s331 + $0x21] sm:$0xff]
        %v343 = vld [vmem:[%s331 + $0x31] sm:$0xff]
        %v344 = vld [vmem:[%s331 + $0x41] sm:$0xff]
        %v345 = vld [vmem:[%s331 + $0x51] sm:$0xff]
        %v346 = vld [vmem:[%s331 + $0x61] sm:$0xff]
        %v347 = vld [vmem:[%s331 + $0x71] sm:$0xff]
        %v348 = vld [vmem:[%s331 + $0x2] sm:$0xff]
        %v349 = vld [vmem:[%s331 + $0x12] sm:$0xff]
        %v350 = vld [vmem:[%s331 + $0x22] sm:$0xff]
        %v351 = vld [vmem:[%s331 + $0x32] sm:$0xff]
        %v352 = vld [vmem:[%s331 + $0x42] sm:$0xff]
        %v353 = vld [vmem:[%s331 + $0x52] sm:$0xff]
        %v354 = vld [vmem:[%s331 + $0x62] sm:$0xff]
        %v355 = vld [vmem:[%s331 + $0x72] sm:$0xff]
        %364 = vrot.lane.b32.xlu0 %v291, 8
        %v365 = vpop.permute.xlu0 %364
        %366 = vrot.lane.b32.xlu0 %v292, 8
        %v367 = vpop.permute.xlu0 %366
        %368 = vrot.lane.b32.xlu0 %v293, 8
        %v369 = vpop.permute.xlu0 %368
        %370 = vrot.lane.b32.xlu0 %v294, 8
        %v371 = vpop.permute.xlu0 %370
        %372 = vrot.lane.b32.xlu0 %v295, 8
        %v373 = vpop.permute.xlu0 %372
        %374 = vrot.lane.b32.xlu0 %v296, 8
        %v375 = vpop.permute.xlu0 %374
        %376 = vrot.lane.b32.xlu0 %v297, 8
        %v377 = vpop.permute.xlu0 %376
        %378 = vrot.lane.b32.xlu0 %v298, 8
        %v379 = vpop.permute.xlu0 %378
        %396 = vrot.lane.b32.xlu0 %v299, 16
        %v397 = vpop.permute.xlu0 %396
        %398 = vrot.lane.b32.xlu0 %v300, 16
        %v399 = vpop.permute.xlu0 %398
        %400 = vrot.lane.b32.xlu0 %v301, 16
        %v401 = vpop.permute.xlu0 %400
        %402 = vrot.lane.b32.xlu0 %v302, 16
        %v403 = vpop.permute.xlu0 %402
        %404 = vrot.lane.b32.xlu0 %v303, 16
        %v405 = vpop.permute.xlu0 %404
        %406 = vrot.lane.b32.xlu0 %v304, 16
        %v407 = vpop.permute.xlu0 %406
        %408 = vrot.lane.b32.xlu0 %v305, 16
        %v409 = vpop.permute.xlu0 %408
        %410 = vrot.lane.b32.xlu0 %v306, 16
        %v411 = vpop.permute.xlu0 %410
        %428 = vrot.lane.b32.xlu0 %v307, 24
        %v429 = vpop.permute.xlu0 %428
        %430 = vrot.lane.b32.xlu0 %v308, 24
        %v431 = vpop.permute.xlu0 %430
        %432 = vrot.lane.b32.xlu0 %v309, 24
        %v433 = vpop.permute.xlu0 %432
        %434 = vrot.lane.b32.xlu0 %v310, 24
        %v435 = vpop.permute.xlu0 %434
        %436 = vrot.lane.b32.xlu0 %v311, 24
        %v437 = vpop.permute.xlu0 %436
        %438 = vrot.lane.b32.xlu0 %v312, 24
        %v439 = vpop.permute.xlu0 %438
        %440 = vrot.lane.b32.xlu0 %v313, 24
        %v441 = vpop.permute.xlu0 %440
        %442 = vrot.lane.b32.xlu0 %v314, 24
        %v443 = vpop.permute.xlu0 %442
        %460 = vrot.lane.b32.xlu0 %v315, 32
        %v461 = vpop.permute.xlu0 %460
        %462 = vrot.lane.b32.xlu0 %v316, 32
        %v463 = vpop.permute.xlu0 %462
        %464 = vrot.lane.b32.xlu0 %v317, 32
        %v465 = vpop.permute.xlu0 %464
        %466 = vrot.lane.b32.xlu0 %v318, 32
        %v467 = vpop.permute.xlu0 %466
        %468 = vrot.lane.b32.xlu0 %v319, 32
        %v469 = vpop.permute.xlu0 %468
        %470 = vrot.lane.b32.xlu0 %v320, 32
        %v471 = vpop.permute.xlu0 %470
        %472 = vrot.lane.b32.xlu0 %v321, 32
        %v473 = vpop.permute.xlu0 %472
        %474 = vrot.lane.b32.xlu0 %v322, 32
        %v475 = vpop.permute.xlu0 %474
        %492 = vrot.lane.b32.xlu0 %v323, 40
        %v493 = vpop.permute.xlu0 %492
        %494 = vrot.lane.b32.xlu0 %v324, 40
        %v495 = vpop.permute.xlu0 %494
        %496 = vrot.lane.b32.xlu0 %v325, 40
        %v497 = vpop.permute.xlu0 %496
        %498 = vrot.lane.b32.xlu0 %v326, 40
        %v499 = vpop.permute.xlu0 %498
        %500 = vrot.lane.b32.xlu0 %v327, 40
        %v501 = vpop.permute.xlu0 %500
        %502 = vrot.lane.b32.xlu0 %v328, 40
        %v503 = vpop.permute.xlu0 %502
        %504 = vrot.lane.b32.xlu0 %v329, 40
        %v505 = vpop.permute.xlu0 %504
        %506 = vrot.lane.b32.xlu0 %v330, 40
        %v507 = vpop.permute.xlu0 %506
        %524 = vrot.lane.b32.xlu0 %v332, 48
        %v525 = vpop.permute.xlu0 %524
        %526 = vrot.lane.b32.xlu0 %v333, 48
        %v527 = vpop.permute.xlu0 %526
        %528 = vrot.lane.b32.xlu0 %v334, 48
        %v529 = vpop.permute.xlu0 %528
        %530 = vrot.lane.b32.xlu0 %v335, 48
        %v531 = vpop.permute.xlu0 %530
        %532 = vrot.lane.b32.xlu0 %v336, 48
        %v533 = vpop.permute.xlu0 %532
        %534 = vrot.lane.b32.xlu0 %v337, 48
        %v535 = vpop.permute.xlu0 %534
        %536 = vrot.lane.b32.xlu0 %v338, 48
        %v537 = vpop.permute.xlu0 %536
        %538 = vrot.lane.b32.xlu0 %v339, 48
        %v539 = vpop.permute.xlu0 %538
        %556 = vrot.lane.b32.xlu0 %v340, 56
        %v557 = vpop.permute.xlu0 %556
        %558 = vrot.lane.b32.xlu0 %v341, 56
        %v559 = vpop.permute.xlu0 %558
        %560 = vrot.lane.b32.xlu0 %v342, 56
        %v561 = vpop.permute.xlu0 %560
        %562 = vrot.lane.b32.xlu0 %v343, 56
        %v563 = vpop.permute.xlu0 %562
        %564 = vrot.lane.b32.xlu0 %v344, 56
        %v565 = vpop.permute.xlu0 %564
        %566 = vrot.lane.b32.xlu0 %v345, 56
        %v567 = vpop.permute.xlu0 %566
        %568 = vrot.lane.b32.xlu0 %v346, 56
        %v569 = vpop.permute.xlu0 %568
        %570 = vrot.lane.b32.xlu0 %v347, 56
        %v571 = vpop.permute.xlu0 %570
        %588 = vrot.lane.b32.xlu0 %v348, 64
        %v589 = vpop.permute.xlu0 %588
        %590 = vrot.lane.b32.xlu0 %v349, 64
        %v591 = vpop.permute.xlu0 %590
        %592 = vrot.lane.b32.xlu0 %v350, 64
        %v593 = vpop.permute.xlu0 %592
        %594 = vrot.lane.b32.xlu0 %v351, 64
        %v595 = vpop.permute.xlu0 %594
        %596 = vrot.lane.b32.xlu0 %v352, 64
        %v597 = vpop.permute.xlu0 %596
        %598 = vrot.lane.b32.xlu0 %v353, 64
        %v599 = vpop.permute.xlu0 %598
        %600 = vrot.lane.b32.xlu0 %v354, 64
        %v601 = vpop.permute.xlu0 %600
        %602 = vrot.lane.b32.xlu0 %v355, 64
        %v603 = vpop.permute.xlu0 %602
        %v612 = vsel %vm244, %v283, %v365
        %v613 = vsel %vm244, %v284, %v367
        %v614 = vsel %vm244, %v285, %v369
        %v615 = vsel %vm244, %v286, %v371
        %v616 = vsel %vm244, %v287, %v373
        %v617 = vsel %vm244, %v288, %v375
        %v618 = vsel %vm244, %v289, %v377
        %v619 = vsel %vm244, %v290, %v379
        %vm620 = vcmask 130048
        %v621 = vsel %vm620, %v612, %v397
        %v622 = vsel %vm620, %v613, %v399
        %v623 = vsel %vm620, %v614, %v401
        %v624 = vsel %vm620, %v615, %v403
        %v625 = vsel %vm620, %v616, %v405
        %v626 = vsel %vm620, %v617, %v407
        %v627 = vsel %vm620, %v618, %v409
        %v628 = vsel %vm620, %v619, %v411
        %vm629 = vcmask 195584
        %v630 = vsel %vm629, %v621, %v429
        %v631 = vsel %vm629, %v622, %v431
        %v632 = vsel %vm629, %v623, %v433
        %v633 = vsel %vm629, %v624, %v435
        %v634 = vsel %vm629, %v625, %v437
        %v635 = vsel %vm629, %v626, %v439
        %v636 = vsel %vm629, %v627, %v441
        %v637 = vsel %vm629, %v628, %v443
        %vm638 = vcmask 261120
        %v639 = vsel %vm638, %v630, %v461
        %v640 = vsel %vm638, %v631, %v463
        %v641 = vsel %vm638, %v632, %v465
        %v642 = vsel %vm638, %v633, %v467
        %v643 = vsel %vm638, %v634, %v469
        %v644 = vsel %vm638, %v635, %v471
        %v645 = vsel %vm638, %v636, %v473
        %v646 = vsel %vm638, %v637, %v475
        %vm647 = vcmask 326656
        %v648 = vsel %vm647, %v639, %v493
        %v649 = vsel %vm647, %v640, %v495
        %v650 = vsel %vm647, %v641, %v497
        %v651 = vsel %vm647, %v642, %v499
        %v652 = vsel %vm647, %v643, %v501
        %v653 = vsel %vm647, %v644, %v503
        %v654 = vsel %vm647, %v645, %v505
        %v655 = vsel %vm647, %v646, %v507
        %vm656 = vcmask 392192
        %v657 = vsel %vm656, %v648, %v525
        %v658 = vsel %vm656, %v649, %v527
        %v659 = vsel %vm656, %v650, %v529
        %v660 = vsel %vm656, %v651, %v531
        %v661 = vsel %vm656, %v652, %v533
        %v662 = vsel %vm656, %v653, %v535
        %v663 = vsel %vm656, %v654, %v537
        %v664 = vsel %vm656, %v655, %v539
        %vm665 = vcmask 457728
        %v666 = vsel %vm665, %v657, %v557
        %v667 = vsel %vm665, %v658, %v559
        %v668 = vsel %vm665, %v659, %v561
        %v669 = vsel %vm665, %v660, %v563
        %v670 = vsel %vm665, %v661, %v565
        %v671 = vsel %vm665, %v662, %v567
        %v672 = vsel %vm665, %v663, %v569
        %v673 = vsel %vm665, %v664, %v571
        %vm674 = vcmask 523264
        %v675 = vsel %vm674, %v666, %v589
        %v676 = vsel %vm674, %v667, %v591
        %v677 = vsel %vm674, %v668, %v593
        %v678 = vsel %vm674, %v669, %v595
        %v679 = vsel %vm674, %v670, %v597
        %v680 = vsel %vm674, %v671, %v599
        %v681 = vsel %vm674, %v672, %v601
        %v682 = vsel %vm674, %v673, %v603
        %v683 = vpack.c.bf16 %v676, %v675
        %v684 = vpack.c.bf16 %v678, %v677
        %v685 = vpack.c.bf16 %v680, %v679
        %v686 = vpack.c.bf16 %v682, %v681
        %v687 = vld [vmem:[%s1] sm:$0xf]
        %v688 = vld [vmem:[%s1 + $0x4] sm:$0xf]
        %v689 = vld [vmem:[%s1 + $0x8] sm:$0xf]
        %v690 = vld [vmem:[%s1 + $0xc] sm:$0xf]
        %v691 = vld [vmem:[%s1 + $0x10] sm:$0xf]
        %v692 = vld [vmem:[%s1 + $0x14] sm:$0xf]
        %v693 = vld [vmem:[%s1 + $0x18] sm:$0xf]
        %v694 = vld [vmem:[%s1 + $0x1c] sm:$0xf]
        %v695 = vld [vmem:[%s1 + $0x20] sm:$0xf]
        %v696 = vld [vmem:[%s2] sm:$0x1]
        %v698 = vlaneseq
        %v699 = vshrl.u32 %v698, 7
        %v700 = vsub.s32 0, %v699
        %v701 = vrot.slane %v696, %v700
        %v712 = vunpack.c.l.b16 %v687
        %v713 = vunpack.c.l.b16 %v688
        %v714 = vunpack.c.l.b16 %v689
        %v715 = vunpack.c.l.b16 %v690
        %v716 = vunpack.c.l.b16 %v691
        %v717 = vunpack.c.l.b16 %v692
        %v718 = vunpack.c.l.b16 %v693
        %v719 = vunpack.c.l.b16 %v694
        %v720 = vunpack.c.l.b16 %v695
        %v721 = vpack.c.b16 %v713, %v712
        %v722 = vpack.c.b16 %v715, %v714
        %v723 = vpack.c.b16 %v717, %v716
        %v724 = vpack.c.b16 %v719, %v718
        %v725 = vpack.c.b16 %v720, %v720
        %vm730 = vcmask 588800
        %v732 = vsel %vm730, %v683, 0
        %v735 = vsel %vm730, %v684, 0
        %v738 = vsel %vm730, %v685, 0
        %v741 = vsel %vm730, %v686, 0
        %vm743 = vcmask 1043456
        %v745 = vsel %vm743, %v725, 0
        %747 = vmatprep.subr.bf16.mxu0 0
        %748 = vmatpush1.bf16.msra.mxu0 %v721
        %749 = vmatprep.subr.bf16.mxu0 0
        %750 = vmatpush1.bf16.msra.mxu0 %v722
        %751 = vmatprep.subr.bf16.mxu0 0
        %752 = vmatpush1.bf16.msra.mxu0 %v723
        %753 = vmatprep.subr.bf16.mxu0 0
        %754 = vmatpush1.bf16.msra.mxu0 %v724
        %755 = vmatprep.subr.bf16.mxu0 0
        %756 = vmatpush1.bf16.msra.mxu0 %v745
        %757 = vmatprep.subr.bf16.mxu0 0
        %758 = vmatpush1.bf16.msra.mxu0 0
        %759 = vmatprep.subr.bf16.mxu0 0
        %760 = vmatpush1.bf16.msra.mxu0 0
        %761 = vmatprep.subr.bf16.mxu0 0
        %762 = vmatpush1.bf16.msra.mxu0 0
        %763 = vmatprep.subr.bf16.mxu0 0
        %764 = vmatpush1.bf16.msra.mxu0 0
        %765 = vmatprep.subr.bf16.mxu0 0
        %766 = vmatpush1.bf16.msra.mxu0 0
        %767 = vmatprep.subr.bf16.mxu0 0
        %768 = vmatpush1.bf16.msra.mxu0 0
        %769 = vmatprep.subr.bf16.mxu0 0
        %770 = vmatpush1.bf16.msra.mxu0 0
        %771 = vmatprep.subr.bf16.mxu0 0
        %772 = vmatpush1.bf16.msra.mxu0 0
        %773 = vmatprep.subr.bf16.mxu0 0
        %774 = vmatpush1.bf16.msra.mxu0 0
        %775 = vmatprep.subr.bf16.mxu0 0
        %776 = vmatpush1.bf16.msra.mxu0 0
        %777 = vmatprep.subr.bf16.mxu0 0
        %778 = vmatpush1.bf16.msra.mxu0 0
        %779 = vmatprep.mubr.bf16.mxu0 0
        %780 = vmatmul.mubr.bf16.gmra.mrb[0].mxu0 %v732
        %v781 = vpop.f32.mrb[0].mxu0
        %v782 = vadd.f32 %v701, %v781
        %v783 = vpop.f32.mrb[0].mxu0
        %v784 = vpop.f32.mrb[0].mxu0
        %v785 = vadd.f32 %v701, %v784
        %v786 = vpop.f32.mrb[0].mxu0
        %787 = vmatprep.mubr.bf16.mxu0 0
        %788 = vmatmul.mubr.bf16.gmra.mrb[0].mxu0 %v735
        %v789 = vpop.f32.mrb[0].mxu0
        %v790 = vadd.f32 %v701, %v789
        %v791 = vpop.f32.mrb[0].mxu0
        %v792 = vpop.f32.mrb[0].mxu0
        %v793 = vadd.f32 %v701, %v792
        %v794 = vpop.f32.mrb[0].mxu0
        %795 = vmatprep.mubr.bf16.mxu0 0
        %796 = vmatmul.mubr.bf16.gmra.mrb[0].mxu0 %v738
        %v797 = vpop.f32.mrb[0].mxu0
        %v798 = vadd.f32 %v701, %v797
        %v799 = vpop.f32.mrb[0].mxu0
        %v800 = vpop.f32.mrb[0].mxu0
        %v801 = vadd.f32 %v701, %v800
        %v802 = vpop.f32.mrb[0].mxu0
        %803 = vmatprep.mubr.bf16.mxu0 0
        %804 = vmatmul.mubr.bf16.gmra.mrb[0].mxu0 %v741
        %v805 = vpop.f32.mrb[0].mxu0
        %v806 = vadd.f32 %v701, %v805
        %v807 = vpop.f32.mrb[0].mxu0
        %v808 = vpop.f32.mrb[0].mxu0
        %v809 = vadd.f32 %v701, %v808
        %v810 = vpop.f32.mrb[0].mxu0
        %811 = vdwg.mxu0
        %v812 = vld [vmem:[%s3] sm:$0x1]
        %v814 = vlaneseq
        %v815 = vshrl.u32 %v814, 7
        %v816 = vsub.s32 0, %v815
        %v817 = vrot.slane %v812, %v816
        %v819 = vmul.f32 %v782, %v817
        %v820 = vmul.f32 %v785, %v817
        %v821 = vmul.f32 %v790, %v817
        %v822 = vmul.f32 %v793, %v817
        %v823 = vmul.f32 %v798, %v817
        %v824 = vmul.f32 %v801, %v817
        %v825 = vmul.f32 %v806, %v817
        %v826 = vmul.f32 %v809, %v817
        %v827 = vld [vmem:[%s4] sm:$0x1]
        %v829 = vlaneseq
        %v830 = vshrl.u32 %v829, 7
        %v831 = vsub.s32 0, %v830
        %v832 = vrot.slane %v827, %v831
        %v834 = vadd.f32 %v819, %v832
        %v835 = vadd.f32 %v820, %v832
        %v836 = vadd.f32 %v821, %v832
        %v837 = vadd.f32 %v822, %v832
        %v838 = vadd.f32 %v823, %v832
        %v839 = vadd.f32 %v824, %v832
        %v840 = vadd.f32 %v825, %v832
        %v841 = vadd.f32 %v826, %v832
        %v842 = vmax.f32 %v834, 0.0
        %v843 = vmax.f32 %v835, 0.0
        %v844 = vmax.f32 %v836, 0.0
        %v845 = vmax.f32 %v837, 0.0
        %v846 = vmax.f32 %v838, 0.0
        %v847 = vmax.f32 %v839, 0.0
        %v848 = vmax.f32 %v840, 0.0
        %v849 = vmax.f32 %v841, 0.0
        %850 = vst.msk [vmem:[%s242] sm:$0xff] %vm674, %v842
        %851 = vst.msk [vmem:[%s242 + $0x8] sm:$0xff] %vm674, %v843
        %852 = vst.msk [vmem:[%s242 + $0x10] sm:$0xff] %vm674, %v844
        %853 = vst.msk [vmem:[%s242 + $0x18] sm:$0xff] %vm674, %v845
        %854 = vst.msk [vmem:[%s242 + $0x20] sm:$0xff] %vm674, %v846
        %855 = vst.msk [vmem:[%s242 + $0x28] sm:$0xff] %vm674, %v847
        %856 = vst.msk [vmem:[%s242 + $0x30] sm:$0xff] %vm674, %v848
        %857 = vst.msk [vmem:[%s242 + $0x38] sm:$0xff] %vm674, %v849
        %s858 = sand.u32 %s140, 1
        %s859 = scalar_lea.sflag [#allocation5], %s858
        %s860 = sand.u32 %s140, 1
        %s861 = smul.addr %s860, 64
        %s862 = scalar_lea.vmem [#allocation6], %s861
        // Predicated region
        $region45: #{tpu_custom_call.1} parent=39 // pred_check
          %p863 = pneg %p150
        $region46: #{tpu_custom_call.1} parent=39 // pred_check_branch
          %865 = sbr.rel (%p863) target = $region48
        $region47: #{tpu_custom_call.1} parent=39 // pred_region
          %s867 = ssub.s32 1024, 1024
          %868 = vsyncadd %s859, %s867
          %s869 = smul.addr %s22, 8
          %s870 = smul.addr %s869, 128
          %s871 = scalar_lea.hbm %s5, %s870
          %s872 = sshll.u32 %s862, 4
          %s873 = int_to_ptr.vmem [resolvable:$true] %s872
          %878 = dma.vmem_to_hbm [thread:$0]  %s873, 1024, %s871, %s859, 128, 128, 8
        $region48: #{tpu_custom_call.1} parent=39 // pred_fallthru
          _
      $region40: #{tpu_custom_call.1} parent=5 // pred_fallthru
        _
      %p879 = scmp.le.s32.totalorder 2, %s17
      // Predicated region
      $region49: #{tpu_custom_call.1} parent=5 // pred_check
        %p880 = pneg %p879
      $region50: #{tpu_custom_call.1} parent=5 // pred_check_branch
        %882 = sbr.rel (%p880) target = $region52
      $region51: #{tpu_custom_call.1} parent=5 // pred_region
        %s883 = ssub.s32 %s17, 2
        // Predicated region
        $region53: #{tpu_custom_call.1} parent=51 // pred_check
          %p884 = pneg %p156
        $region54: #{tpu_custom_call.1} parent=51 // pred_check_branch
          %886 = sbr.rel (%p884) target = $region56
        $region55: #{tpu_custom_call.1} parent=51 // pred_region
          %s887 = sand.u32 %s141, 1
          %s888 = scalar_lea.sflag [#allocation5], %s887
          %s889 = sand.u32 %s141, 1
          %s890 = smul.addr %s889, 64
          %s891 = scalar_lea.vmem [#allocation6], %s890
          %892 = dma.done %s888, 1024
        $region56: #{tpu_custom_call.1} parent=51 // pred_fallthru
          _
      $region52: #{tpu_custom_call.1} parent=5 // pred_fallthru
        _
    $region6: #{tpu_custom_call.1} parent=1 // loop_footer
      %s21 = sadd.s32 1, %s17
    $region7: #{tpu_custom_call.1} parent=1 // loop_footer_branch
      %16 = sbr.rel target = $region3
    $region8: #{tpu_custom_call.1} parent=1 // loop_exit
      _
    %893 = vsyncpa [#allocation4], 1
    %s894 = scalar_lea.sflag [#allocation4], 1
    %895 = vsyncpa %s894, 1
    %896 = vsyncpa [#allocation5], 1
    %s897 = scalar_lea.sflag [#allocation5], 1
    %898 = vsyncpa %s897, 1

</llo_original>
